<compile_context>
chip_gen: v6e
topology: v6e:2x2x1
jax: 0.10.0
libtpu: 0.0.40
codegen_flags: <defaults>
</compile_context>

<pallas_src>
import functools

import jax
import jax.numpy as jnp
import numpy as np
from jax import lax
from jax.experimental import pallas as pl
from jax.experimental.pallas import tpu as pltpu

_LRELU_SLOPE = 0.2


def _round_up(x, m):
    return (x + m - 1) // m * m


# ----------------------------------------------------------------------------
# Pallas kernels
# ----------------------------------------------------------------------------
def _conv_bias_lrelu_kernel(p_ref, w_ref, b_ref, o_ref, *, slope):
    """One M-tile of conv: o = leaky_relu(patches @ w_folded + bias)."""
    acc = jnp.dot(p_ref[...], w_ref[...], preferred_element_type=jnp.float32)
    acc = acc + b_ref[...]
    o_ref[...] = jnp.where(acc >= 0, acc, acc * slope).astype(o_ref.dtype)


def _final_conv_pool_linear_kernel(p_ref, w_ref, b_ref, lw_ref, lb_ref, o_ref,
                                   *, slope, n, s):
    """Fused: last conv (tap-folded matmul) + LeakyReLU + global avg-pool + Linear.

    p_ref : (n*s, Kfold)   im2col patches of the last stage input
    w_ref : (Kfold, Cp)    folded conv weight (Cout padded to Cp)
    b_ref : (1, Cp)        conv bias
    lw_ref: (Cp, Cp)       linear weight, (in, out) layout, zero-padded
    lb_ref: (1, Cp)        linear bias
    o_ref : (n, Cp)
    """
    acc = jnp.dot(p_ref[...], w_ref[...], preferred_element_type=jnp.float32)
    acc = acc + b_ref[...]
    y = jnp.where(acc >= 0, acc, acc * slope)                 # (n*s, Cp) f32
    if s == 1:                                                # power-of-2 spatial
        pooled = y                                            # pool is identity
    else:
        pooled = y.reshape(n, s, y.shape[-1]).sum(axis=1) * (1.0 / s)
    out = jnp.dot(pooled, lw_ref[...], preferred_element_type=jnp.float32)
    o_ref[...] = (out + lb_ref[...]).astype(o_ref.dtype)


# ----------------------------------------------------------------------------
# Pure-JAX glue (trace-time im2col, tiling heuristics)
# ----------------------------------------------------------------------------
def _im2col_folded(x_nhwc, KH, KW, stride, padding):
    """(N,H,W,Cin) -> (N*Ho*Wo, KH*KW*Cin), inner order (kh, kw, cin)."""
    N, H, W, Cin = x_nhwc.shape
    Ho = (H + 2 * padding - KH) // stride + 1
    Wo = (W + 2 * padding - KW) // stride + 1
    xp = jnp.pad(x_nhwc, ((0, 0), (padding, padding), (padding, padding), (0, 0)))
    taps = []
    for kh in range(KH):
        for kw in range(KW):
            taps.append(
                xp[:, kh:kh + stride * (Ho - 1) + 1:stride,
                      kw:kw + stride * (Wo - 1) + 1:stride, :])
    patches = jnp.concatenate(taps, axis=-1)            # (N, Ho, Wo, KH*KW*Cin)
    return patches.reshape(N * Ho * Wo, KH * KW * Cin), (N, Ho, Wo)


def _pick_m_tile(M, Kfold, Cout_p, dtype_bytes=4, budget_bytes=12 << 20):
    """Largest M tile s.t. double-buffered in/out tiles + resident weight fit."""
    weight_bytes = 2 * (Kfold + 1) * Cout_p * dtype_bytes    # (possibly 2-buffered)
    per_row = 2 * (Kfold + Cout_p) * dtype_bytes             # in + out, 2-buffered
    tm = (budget_bytes - weight_bytes) // max(per_row, 1)
    tm = max(8, min(1024, int(tm)))
    tm = (tm // 8) * 8
    return min(tm, _round_up(M, 8))


def _pad_cout(w_hwio, bias):
    """Fold 3x3 taps into K and zero-pad Cout to a lane-dense multiple of 128."""
    KH, KW, Cin, Cout = w_hwio.shape
    Kfold = KH * KW * Cin
    Cout_p = _round_up(Cout, 128)
    w_flat = w_hwio.reshape(Kfold, Cout)
    if Cout_p != Cout:
        w_flat = jnp.pad(w_flat, ((0, 0), (0, Cout_p - Cout)))
        bias = jnp.pad(bias, (0, Cout_p - Cout))
    return w_flat, bias.reshape(1, Cout_p).astype(jnp.float32), Cout, Cout_p


# ----------------------------------------------------------------------------
# Wrappers
# ----------------------------------------------------------------------------
def conv2d_bias_lrelu_pallas(x_nhwc, w_hwio, bias, *, stride, padding,
                             slope=_LRELU_SLOPE):
    """3x3 conv + bias + LeakyReLU via one tap-folded matmul per M tile."""
    KH, KW, _, _ = w_hwio.shape
    patches, (N, Ho, Wo) = _im2col_folded(x_nhwc, KH, KW, stride, padding)
    M, Kfold = patches.shape
    w_flat, bias2, Cout, Cout_p = _pad_cout(w_hwio, bias)

    TM = _pick_m_tile(M, Kfold, Cout_p)
    M_pad = _round_up(M, TM)
    if M_pad != M:
        patches = jnp.pad(patches, ((0, M_pad - M), (0, 0)))

    out = pl.pallas_call(
        functools.partial(_conv_bias_lrelu_kernel, slope=slope),
        out_shape=jax.ShapeDtypeStruct((M_pad, Cout_p), x_nhwc.dtype),
        grid=(M_pad // TM,),
        in_specs=[
            pl.BlockSpec((TM, Kfold), lambda i: (i, 0)),       # streamed patches
            pl.BlockSpec((Kfold, Cout_p), lambda i: (0, 0)),   # resident weight
            pl.BlockSpec((1, Cout_p), lambda i: (0, 0)),       # resident bias
        ],
        out_specs=pl.BlockSpec((TM, Cout_p), lambda i: (i, 0)),
        compiler_params=pltpu.CompilerParams(
            dimension_semantics=("parallel",)),
    )(patches, w_flat, bias2)

    return out[:M, :Cout].reshape(N, Ho, Wo, Cout)


def final_conv_pool_linear_pallas(x_nhwc, w_hwio, bias, lin_w, lin_b, *,
                                  stride, padding, slope=_LRELU_SLOPE):
    """Last conv + LeakyReLU + AdaptiveAvgPool2d(1) + Linear, one kernel launch."""
    KH, KW, _, _ = w_hwio.shape
    patches, (N, Ho, Wo) = _im2col_folded(x_nhwc, KH, KW, stride, padding)
    _, Kfold = patches.shape
    S = Ho * Wo
    w_flat, bias2, Cout, Cout_p = _pad_cout(w_hwio, bias)

    lw = lin_w  # (in, out) layout (= PyTorch W^T)
    lb = lin_b
    if Cout_p != Cout:
        pad = Cout_p - Cout
        lw = jnp.pad(lin_w, ((0, pad), (0, pad)))
        lb = jnp.pad(lin_b, (0, pad))
    lb2 = lb.reshape(1, Cout_p).astype(jnp.float32)

    out = pl.pallas_call(
        functools.partial(_final_conv_pool_linear_kernel,
                          slope=slope, n=N, s=S),
        out_shape=jax.ShapeDtypeStruct((N, Cout_p), x_nhwc.dtype),
    )(patches, w_flat, bias2, lw, lb2)
    return out[:, :Cout]


# ----------------------------------------------------------------------------
# StyleBlock module (forward only)
# ----------------------------------------------------------------------------
def init_params(key, in_c, out_c, spatial):
    num_pools = int(np.log2(spatial))
    keys = jax.random.split(key, 2 * num_pools + 2)
    convs = []
    c_in = in_c
    for i in range(num_pools):
        w = 0.1 * jax.random.normal(keys[2 * i], (3, 3, c_in, out_c), jnp.float32)
        b = 0.1 * jax.random.normal(keys[2 * i + 1], (out_c,), jnp.float32)
        convs.append((w, b))
        c_in = out_c
    # linear weight stored (in_features, out_features) = PyTorch W^T
    lin_w = 0.1 * jax.random.normal(keys[-2], (out_c, out_c), jnp.float32)
    lin_b = 0.1 * jax.random.normal(keys[-1], (out_c,), jnp.float32)
    return {"convs": convs, "lin_w": lin_w, "lin_b": lin_b}


def style_block_forward(x_nchw, params):
    x = jnp.transpose(x_nchw, (0, 2, 3, 1))  # NCHW -> NHWC
    convs = params["convs"]
    for w, b in convs[:-1]:
        x = conv2d_bias_lrelu_pallas(x, w, b, stride=2, padding=1)
    w_last, b_last = convs[-1]
    return final_conv_pool_linear_pallas(
        x, w_last, b_last, params["lin_w"], params["lin_b"],
        stride=2, padding=1)


# ----------------------------------------------------------------------------
# Pure-JAX reference (mirrors the PyTorch forward)
# ----------------------------------------------------------------------------
def ref_forward(x_nchw, params):
    x = jnp.transpose(x_nchw, (0, 2, 3, 1))
    for w, b in params["convs"]:
        x = lax.conv_general_dilated(
            x, w, (2, 2), [(1, 1), (1, 1)],
            dimension_numbers=("NHWC", "HWIO", "NHWC")) + b
        x = jnp.where(x >= 0, x, _LRELU_SLOPE * x)
    pooled = x.mean(axis=(1, 2))
    return pooled @ params["lin_w"] + params["lin_b"]


# ----------------------------------------------------------------------------
if __name__ == "__main__":
    key = jax.random.PRNGKey(0)
    kx1, kp1, kx2, kp2 = jax.random.split(key, 4)

    # config 1: in_c=4, out_c=32, spatial=16 -> 4 conv+LeakyReLU stages, batch=2
    in_c, out_c, spatial = 4, 32, 16
    x1 = jax.random.normal(kx1, (2, in_c, spatial, spatial), jnp.float32)
    p1 = init_params(kp1, in_c, out_c, spatial)
    out1 = style_block_forward(x1, p1)
    jax.block_until_ready(out1)
    ref1 = ref_forward(x1, p1)
    np.testing.assert_allclose(np.asarray(out1), np.asarray(ref1),
                               rtol=1e-4, atol=1e-4)
    assert out1.shape == (2, out_c)

    # config 2: in_c=3, out_c=64, spatial=8 -> 3 stages
    in_c2, out_c2, spatial2 = 3, 64, 8
    x2 = jax.random.normal(kx2, (2, in_c2, spatial2, spatial2), jnp.float32)
    p2 = init_params(kp2, in_c2, out_c2, spatial2)
    out2 = style_block_forward(x2, p2)
    jax.block_until_ready(out2)
    ref2 = ref_forward(x2, p2)
    np.testing.assert_allclose(np.asarray(out2), np.asarray(ref2),
                               rtol=1e-4, atol=1e-4)
    assert out2.shape == (2, out_c2)

    print("KERNEL_OK")
</pallas_src>

<mosaic_0001>
module attributes {stable_mosaic.version = 11 : i64} {
  func.func @_conv_bias_lrelu_kernel(%arg0: i32, %arg1: memref<128x36xf32, #tpu.memory_space<vmem>>, %arg2: memref<36x128xf32, #tpu.memory_space<vmem>>, %arg3: memref<1x128xf32, #tpu.memory_space<vmem>>, %arg4: memref<128x128xf32, #tpu.memory_space<vmem>>) attributes {dimension_semantics = [#tpu.dimension_semantics<parallel>], iteration_bounds = array<i64: 1>, scalar_prefetch = 0 : i64, scratch_operands = 0 : i64, tpu.core_type = #tpu.core_type<tc>, window_params = [{transform_indices = @transform_0, window_bounds = array<i64: 128, 36>}, {pipeline_mode = #tpu.pipeline_mode<synchronous>, transform_indices = @transform_1, window_bounds = array<i64: 36, 128>}, {pipeline_mode = #tpu.pipeline_mode<synchronous>, transform_indices = @transform_2, window_bounds = array<i64: 1, 128>}, {transform_indices = @transform_3, window_bounds = array<i64: 128, 128>}]} {
    %c0 = arith.constant 0 : index
    %c0_0 = arith.constant 0 : index
    %0 = vector.load %arg1[%c0, %c0_0] : memref<128x36xf32, #tpu.memory_space<vmem>>, vector<128x36xf32>
    %c0_1 = arith.constant 0 : index
    %c0_2 = arith.constant 0 : index
    %1 = vector.load %arg2[%c0_1, %c0_2] : memref<36x128xf32, #tpu.memory_space<vmem>>, vector<36x128xf32>
    %cst = arith.constant dense<0.000000e+00> : vector<128x128xf32>
    %2 = tpu.matmul %0, %1, %cst {dimension_numbers = #tpu.dot_dimension_numbers<[1], [0], [0], [1], [0, 0, 1, 1], [], []>} : vector<128x36xf32>, vector<36x128xf32>, vector<128x128xf32> -> vector<128x128xf32>
    %c0_3 = arith.constant 0 : index
    %c0_4 = arith.constant 0 : index
    %3 = vector.load %arg3[%c0_3, %c0_4] : memref<1x128xf32, #tpu.memory_space<vmem>>, vector<1x128xf32>
    %4 = vector.broadcast %3 : vector<1x128xf32> to vector<128x128xf32>
    %5 = arith.addf %2, %4 : vector<128x128xf32>
    %cst_5 = arith.constant 0.000000e+00 : f32
    %6 = vector.broadcast %cst_5 : f32 to vector<128x128xf32>
    %7 = arith.cmpf oge, %5, %6 : vector<128x128xf32>
    %cst_6 = arith.constant 2.000000e-01 : f32
    %8 = vector.broadcast %cst_6 : f32 to vector<128x128xf32>
    %9 = arith.mulf %5, %8 : vector<128x128xf32>
    %10 = arith.select %7, %5, %9 : vector<128x128xi1>, vector<128x128xf32>
    %c0_7 = arith.constant 0 : index
    %c0_8 = arith.constant 0 : index
    %11 = vector.load %arg4[%c0_7, %c0_8] : memref<128x128xf32, #tpu.memory_space<vmem>>, vector<128x128xf32>
    tpu.vector_store %arg4[%c0_7, %c0_8], %10 {strides = array<i32>} : memref<128x128xf32, #tpu.memory_space<vmem>>, vector<128x128xf32>,
    return
  }
  func.func @transform_0(%arg0: i32) -> (i32, i32) {
    %c0_i32 = arith.constant 0 : i32
    %c0_i32_0 = arith.constant 0 : i32
    return %arg0, %c0_i32 : i32, i32
  }
  func.func @transform_1(%arg0: i32) -> (i32, i32) {
    %c0_i32 = arith.constant 0 : i32
    %c0_i32_0 = arith.constant 0 : i32
    %c0_i32_1 = arith.constant 0 : i32
    return %c0_i32, %c0_i32_0 : i32, i32
  }
  func.func @transform_2(%arg0: i32) -> (i32, i32) {
    %c0_i32 = arith.constant 0 : i32
    %c0_i32_0 = arith.constant 0 : i32
    %c0_i32_1 = arith.constant 0 : i32
    return %c0_i32, %c0_i32_0 : i32, i32
  }
  func.func @transform_3(%arg0: i32) -> (i32, i32) {
    %c0_i32 = arith.constant 0 : i32
    %c0_i32_0 = arith.constant 0 : i32
    return %arg0, %c0_i32 : i32, i32
  }
}

</mosaic_0001>

<llo_original>
// kernel: tpu_custom_call.1
$region0: #{tpu_custom_call.1}
  #allocation0 [shape = 'u32[]', space=smem, size = 0x4, offset = 0x4, fixed_abs, tag = 'smem constant byte address 0x4 - core index']
  #allocation1 [shape = 'u32[144,128]{1,0:T(1,128)}', space=vmem, size = 0x12000, scoped, tag = 'internal scratch']
  %s0 = inlined_call_operand.vmem [shape: f32[128,36], index: 0, kind: input, shape index: {}]
  %s1 = inlined_call_operand.vmem [shape: f32[36,128], index: 1, kind: input, shape index: {}]
  %s2 = inlined_call_operand.vmem [shape: f32[1,128], index: 2, kind: input, shape index: {}]
  %s3 = inlined_call_operand.hbm [shape: f32[128,128], index: 3, kind: output, shape index: {}]
  %s4 = sld [smem:[#allocation0]]
  $region22: #{tpu_custom_call.1} parent=0
    _
  %s6 = ssub.s32 1, %s4
  %s7 = scalar_select 0, %s6, %s4
  $region1: #{tpu_custom_call.1} parent=0
    #allocation2 [shape = 'u8[65536]{0}', space=vmem, size = 0x10000, scoped, tag = 'output window, operand 0, single buffered']
    #allocation3 [shape = 's32[1]{0}', space=sflag, size = 0x4, scoped, tag = 'scoped memory for tpu_custom_call.1']
    %8 = vsyncpa [#allocation3], 0
    // Predicated region
    $region2: #{tpu_custom_call.1} parent=1 // pred_check
      _
    $region3: #{tpu_custom_call.1} parent=1 // pred_check_branch
      %10 = sbr.rel (0) target = $region5
    $region4: #{tpu_custom_call.1} parent=1 // pred_region
      _
    $region5: #{tpu_custom_call.1} parent=1 // pred_fallthru
      _
    // Predicated region
    $region6: #{tpu_custom_call.1} parent=1 // pred_check
      _
    $region7: #{tpu_custom_call.1} parent=1 // pred_check_branch
      %12 = sbr.rel (0) target = $region9
    $region8: #{tpu_custom_call.1} parent=1 // pred_region
      _
    $region9: #{tpu_custom_call.1} parent=1 // pred_fallthru
      _
    // Predicated region
    $region10: #{tpu_custom_call.1} parent=1 // pred_check
      _
    $region11: #{tpu_custom_call.1} parent=1 // pred_check_branch
      %14 = sbr.rel (0) target = $region13
    $region12: #{tpu_custom_call.1} parent=1 // pred_region
      _
    $region13: #{tpu_custom_call.1} parent=1 // pred_fallthru
      _
    %v15 = vld [vmem:[%s0] sm:$0xff]
    %v16 = vld [vmem:[%s0 + $0x8] sm:$0xff]
    %v17 = vld [vmem:[%s0 + $0x10] sm:$0xff]
    %v18 = vld [vmem:[%s0 + $0x18] sm:$0xff]
    %v19 = vld [vmem:[%s0 + $0x20] sm:$0xff]
    %v20 = vld [vmem:[%s0 + $0x28] sm:$0xff]
    %v21 = vld [vmem:[%s0 + $0x30] sm:$0xff]
    %v22 = vld [vmem:[%s0 + $0x38] sm:$0xff]
    %v23 = vld [vmem:[%s0 + $0x40] sm:$0xff]
    %v24 = vld [vmem:[%s0 + $0x48] sm:$0xff]
    %v25 = vld [vmem:[%s0 + $0x50] sm:$0xff]
    %v26 = vld [vmem:[%s0 + $0x58] sm:$0xff]
    %v27 = vld [vmem:[%s0 + $0x60] sm:$0xff]
    %v28 = vld [vmem:[%s0 + $0x68] sm:$0xff]
    %v29 = vld [vmem:[%s0 + $0x70] sm:$0xff]
    %v30 = vld [vmem:[%s0 + $0x78] sm:$0xff]
    %v31 = vld [vmem:[%s1] sm:$0xff]
    %v32 = vld [vmem:[%s1 + $0x8] sm:$0xff]
    %v33 = vld [vmem:[%s1 + $0x10] sm:$0xff]
    %v34 = vld [vmem:[%s1 + $0x18] sm:$0xff]
    %v35 = vld [vmem:[%s1 + $0x20] sm:$0xf]
    %v36 = vld [vmem:[%s2] sm:$0x1]
    %v38 = vlaneseq
    %v39 = vshrl.u32 %v38, 7
    %v40 = vsub.s32 0, %v39
    %v41 = vrot.slane %v36, %v40
    %vm43 = vcmask 293888
    %v45 = vsel %vm43, %v15, 0
    %v48 = vsel %vm43, %v16, 0
    %v51 = vsel %vm43, %v17, 0
    %v54 = vsel %vm43, %v18, 0
    %v57 = vsel %vm43, %v19, 0
    %v60 = vsel %vm43, %v20, 0
    %v63 = vsel %vm43, %v21, 0
    %v66 = vsel %vm43, %v22, 0
    %v69 = vsel %vm43, %v23, 0
    %v72 = vsel %vm43, %v24, 0
    %v75 = vsel %vm43, %v25, 0
    %v78 = vsel %vm43, %v26, 0
    %v81 = vsel %vm43, %v27, 0
    %v84 = vsel %vm43, %v28, 0
    %v87 = vsel %vm43, %v29, 0
    %v90 = vsel %vm43, %v30, 0
    %vm92 = vcmask 1043456
    %v94 = vsel %vm92, %v35, 0
    %96 = vmatprep.subr.mxu0 0.0
    %97 = vmatpush1.msra.mxu0 0.0
    %98 = vmatprep.subr.mxu0 0.0
    %99 = vmatpush1.msra.mxu0 0.0
    %100 = vmatprep.subr.mxu0 0.0
    %101 = vmatpush1.msra.mxu0 0.0
    %102 = vmatprep.subr.mxu0 0.0
    %103 = vmatpush1.msra.mxu0 0.0
    %104 = vmatprep.subr.mxu0 0.0
    %105 = vmatpush1.msra.mxu0 0.0
    %106 = vmatprep.subr.mxu0 0.0
    %107 = vmatpush1.msra.mxu0 0.0
    %108 = vmatprep.subr.mxu0 0.0
    %109 = vmatpush1.msra.mxu0 0.0
    %110 = vmatprep.subr.mxu0 0.0
    %111 = vmatpush1.msra.mxu0 0.0
    %112 = vmatprep.subr.mxu0 0.0
    %113 = vmatpush1.msra.mxu0 0.0
    %114 = vmatprep.subr.mxu0 0.0
    %115 = vmatpush1.msra.mxu0 0.0
    %116 = vmatprep.subr.mxu0 0.0
    %117 = vmatpush1.msra.mxu0 0.0
    %118 = vmatprep.subr.mxu0 0.0
    %119 = vmatpush1.msra.mxu0 %v94
    %120 = vmatprep.subr.mxu0 0.0
    %121 = vmatpush1.msra.mxu0 %v34
    %122 = vmatprep.subr.mxu0 0.0
    %123 = vmatpush1.msra.mxu0 %v33
    %124 = vmatprep.subr.mxu0 0.0
    %125 = vmatpush1.msra.mxu0 %v32
    %126 = vmatprep.subr.mxu0 0.0
    %127 = vmatpush1.msra.mxu0 %v31
    %128 = vmatprep.subr.mxu0 0.0
    %129 = vmatpush2.msra.mxu0 0.0
    %130 = vmatprep.subr.mxu0 0.0
    %131 = vmatpush2.msra.mxu0 0.0
    %132 = vmatprep.subr.mxu0 0.0
    %133 = vmatpush2.msra.mxu0 0.0
    %134 = vmatprep.subr.mxu0 0.0
    %135 = vmatpush2.msra.mxu0 0.0
    %136 = vmatprep.subr.mxu0 0.0
    %137 = vmatpush2.msra.mxu0 0.0
    %138 = vmatprep.subr.mxu0 0.0
    %139 = vmatpush2.msra.mxu0 0.0
    %140 = vmatprep.subr.mxu0 0.0
    %141 = vmatpush2.msra.mxu0 0.0
    %142 = vmatprep.subr.mxu0 0.0
    %143 = vmatpush2.msra.mxu0 0.0
    %144 = vmatprep.subr.mxu0 0.0
    %145 = vmatpush2.msra.mxu0 0.0
    %146 = vmatprep.subr.mxu0 0.0
    %147 = vmatpush2.msra.mxu0 0.0
    %148 = vmatprep.subr.mxu0 0.0
    %149 = vmatpush2.msra.mxu0 0.0
    %150 = vmatprep.subr.mxu0 0.0
    %151 = vmatpush2.msra.mxu0 0.0
    %152 = vmatprep.subr.mxu0 0.0
    %153 = vmatpush2.msra.mxu0 0.0
    %154 = vmatprep.subr.mxu0 0.0
    %155 = vmatpush2.msra.mxu0 0.0
    %156 = vmatprep.subr.mxu0 0.0
    %157 = vmatpush2.msra.mxu0 0.0
    %158 = vmatprep.subr.mxu0 0.0
    %159 = vmatpush2.msra.mxu0 0.0
    %160 = vmatprep.mubr.f32.mxu0 0.0
    %161 = vmatmul.mubr.f32.gmra.mxu0 %v45
    %v162 = vpop.f32.mrf.mxu0
    %v163 = vadd.f32 %v41, %v162
    %v164 = vpop.f32.mrf.mxu0
    %165 = vmatprep.mubr.f32.mxu0 0.0
    %166 = vmatmul.mubr.f32.gmra.mxu0 %v48
    %v167 = vpop.f32.mrf.mxu0
    %v168 = vadd.f32 %v41, %v167
    %v169 = vpop.f32.mrf.mxu0
    %170 = vmatprep.mubr.f32.mxu0 0.0
    %171 = vmatmul.mubr.f32.gmra.mxu0 %v51
    %v172 = vpop.f32.mrf.mxu0
    %v173 = vadd.f32 %v41, %v172
    %v174 = vpop.f32.mrf.mxu0
    %175 = vmatprep.mubr.f32.mxu0 0.0
    %176 = vmatmul.mubr.f32.gmra.mxu0 %v54
    %v177 = vpop.f32.mrf.mxu0
    %v178 = vadd.f32 %v41, %v177
    %v179 = vpop.f32.mrf.mxu0
    %180 = vmatprep.mubr.f32.mxu0 0.0
    %181 = vmatmul.mubr.f32.gmra.mxu0 %v57
    %v182 = vpop.f32.mrf.mxu0
    %v183 = vadd.f32 %v41, %v182
    %v184 = vpop.f32.mrf.mxu0
    %185 = vmatprep.mubr.f32.mxu0 0.0
    %186 = vmatmul.mubr.f32.gmra.mxu0 %v60
    %v187 = vpop.f32.mrf.mxu0
    %v188 = vadd.f32 %v41, %v187
    %v189 = vpop.f32.mrf.mxu0
    %190 = vmatprep.mubr.f32.mxu0 0.0
    %191 = vmatmul.mubr.f32.gmra.mxu0 %v63
    %v192 = vpop.f32.mrf.mxu0
    %v193 = vadd.f32 %v41, %v192
    %v194 = vpop.f32.mrf.mxu0
    %195 = vmatprep.mubr.f32.mxu0 0.0
    %196 = vmatmul.mubr.f32.gmra.mxu0 %v66
    %v197 = vpop.f32.mrf.mxu0
    %v198 = vadd.f32 %v41, %v197
    %v199 = vpop.f32.mrf.mxu0
    %200 = vmatprep.mubr.f32.mxu0 0.0
    %201 = vmatmul.mubr.f32.gmra.mxu0 %v69
    %v202 = vpop.f32.mrf.mxu0
    %v203 = vadd.f32 %v41, %v202
    %v204 = vpop.f32.mrf.mxu0
    %205 = vmatprep.mubr.f32.mxu0 0.0
    %206 = vmatmul.mubr.f32.gmra.mxu0 %v72
    %v207 = vpop.f32.mrf.mxu0
    %v208 = vadd.f32 %v41, %v207
    %v209 = vpop.f32.mrf.mxu0
    %210 = vmatprep.mubr.f32.mxu0 0.0
    %211 = vmatmul.mubr.f32.gmra.mxu0 %v75
    %v212 = vpop.f32.mrf.mxu0
    %v213 = vadd.f32 %v41, %v212
    %v214 = vpop.f32.mrf.mxu0
    %215 = vmatprep.mubr.f32.mxu0 0.0
    %216 = vmatmul.mubr.f32.gmra.mxu0 %v78
    %v217 = vpop.f32.mrf.mxu0
    %v218 = vadd.f32 %v41, %v217
    %v219 = vpop.f32.mrf.mxu0
    %220 = vmatprep.mubr.f32.mxu0 0.0
    %221 = vmatmul.mubr.f32.gmra.mxu0 %v81
    %v222 = vpop.f32.mrf.mxu0
    %v223 = vadd.f32 %v41, %v222
    %v224 = vpop.f32.mrf.mxu0
    %225 = vmatprep.mubr.f32.mxu0 0.0
    %226 = vmatmul.mubr.f32.gmra.mxu0 %v84
    %v227 = vpop.f32.mrf.mxu0
    %v228 = vadd.f32 %v41, %v227
    %v229 = vpop.f32.mrf.mxu0
    %230 = vmatprep.mubr.f32.mxu0 0.0
    %231 = vmatmul.mubr.f32.gmra.mxu0 %v87
    %v232 = vpop.f32.mrf.mxu0
    %v233 = vadd.f32 %v41, %v232
    %v234 = vpop.f32.mrf.mxu0
    %235 = vmatprep.mubr.f32.mxu0 0.0
    %236 = vmatmul.mubr.f32.gmra.mxu0 %v90
    %v237 = vpop.f32.mrf.mxu0
    %v238 = vadd.f32 %v41, %v237
    %v239 = vpop.f32.mrf.mxu0
    %240 = vdwg.mxu0
    %vm241 = vcmp.ge.f32.partialorder %v163, 0.0
    %vm242 = vcmp.ge.f32.partialorder %v168, 0.0
    %vm243 = vcmp.ge.f32.partialorder %v173, 0.0
    %vm244 = vcmp.ge.f32.partialorder %v178, 0.0
    %vm245 = vcmp.ge.f32.partialorder %v183, 0.0
    %vm246 = vcmp.ge.f32.partialorder %v188, 0.0
    %vm247 = vcmp.ge.f32.partialorder %v193, 0.0
    %vm248 = vcmp.ge.f32.partialorder %v198, 0.0
    %vm249 = vcmp.ge.f32.partialorder %v203, 0.0
    %vm250 = vcmp.ge.f32.partialorder %v208, 0.0
    %vm251 = vcmp.ge.f32.partialorder %v213, 0.0
    %vm252 = vcmp.ge.f32.partialorder %v218, 0.0
    %vm253 = vcmp.ge.f32.partialorder %v223, 0.0
    %vm254 = vcmp.ge.f32.partialorder %v228, 0.0
    %vm255 = vcmp.ge.f32.partialorder %v233, 0.0
    %vm256 = vcmp.ge.f32.partialorder %v238, 0.0
    %v257 = vmul.f32 %v163, 0.2
    %v258 = vmul.f32 %v168, 0.2
    %v259 = vmul.f32 %v173, 0.2
    %v260 = vmul.f32 %v178, 0.2
    %v261 = vmul.f32 %v183, 0.2
    %v262 = vmul.f32 %v188, 0.2
    %v263 = vmul.f32 %v193, 0.2
    %v264 = vmul.f32 %v198, 0.2
    %v265 = vmul.f32 %v203, 0.2
    %v266 = vmul.f32 %v208, 0.2
    %v267 = vmul.f32 %v213, 0.2
    %v268 = vmul.f32 %v218, 0.2
    %v269 = vmul.f32 %v223, 0.2
    %v270 = vmul.f32 %v228, 0.2
    %v271 = vmul.f32 %v233, 0.2
    %v272 = vmul.f32 %v238, 0.2
    %v273 = vsel %vm241, %v163, %v257
    %v274 = vsel %vm242, %v168, %v258
    %v275 = vsel %vm243, %v173, %v259
    %v276 = vsel %vm244, %v178, %v260
    %v277 = vsel %vm245, %v183, %v261
    %v278 = vsel %vm246, %v188, %v262
    %v279 = vsel %vm247, %v193, %v263
    %v280 = vsel %vm248, %v198, %v264
    %v281 = vsel %vm249, %v203, %v265
    %v282 = vsel %vm250, %v208, %v266
    %v283 = vsel %vm251, %v213, %v267
    %v284 = vsel %vm252, %v218, %v268
    %v285 = vsel %vm253, %v223, %v269
    %v286 = vsel %vm254, %v228, %v270
    %v287 = vsel %vm255, %v233, %v271
    %v288 = vsel %vm256, %v238, %v272
    %289 = vst [vmem:[#allocation2] sm:$0xff] %v273
    %290 = vst [vmem:[#allocation2 + $0x8] sm:$0xff] %v274
    %291 = vst [vmem:[#allocation2 + $0x10] sm:$0xff] %v275
    %292 = vst [vmem:[#allocation2 + $0x18] sm:$0xff] %v276
    %293 = vst [vmem:[#allocation2 + $0x20] sm:$0xff] %v277
    %294 = vst [vmem:[#allocation2 + $0x28] sm:$0xff] %v278
    %295 = vst [vmem:[#allocation2 + $0x30] sm:$0xff] %v279
    %296 = vst [vmem:[#allocation2 + $0x38] sm:$0xff] %v280
    %297 = vst [vmem:[#allocation2 + $0x40] sm:$0xff] %v281
    %298 = vst [vmem:[#allocation2 + $0x48] sm:$0xff] %v282
    %299 = vst [vmem:[#allocation2 + $0x50] sm:$0xff] %v283
    %300 = vst [vmem:[#allocation2 + $0x58] sm:$0xff] %v284
    %301 = vst [vmem:[#allocation2 + $0x60] sm:$0xff] %v285
    %302 = vst [vmem:[#allocation2 + $0x68] sm:$0xff] %v286
    %303 = vst [vmem:[#allocation2 + $0x70] sm:$0xff] %v287
    %304 = vst [vmem:[#allocation2 + $0x78] sm:$0xff] %v288
    // Predicated region
    $region14: #{tpu_custom_call.1} parent=1 // pred_check
      _
    $region15: #{tpu_custom_call.1} parent=1 // pred_check_branch
      %306 = sbr.rel (0) target = $region17
    $region16: #{tpu_custom_call.1} parent=1 // pred_region
      %s308 = ssub.s32 2048, 2048
      %309 = vsyncadd [#allocation3], %s308
      %s310 = sshll.u32 [#allocation2], 4
      %s311 = int_to_ptr.vmem [resolvable:$true] %s310
      %316 = dma.vmem_to_hbm [thread:$0]  %s311, 2048, %s3, [#allocation3], 128, 128, 8
    $region17: #{tpu_custom_call.1} parent=1 // pred_fallthru
      _
    // Predicated region
    $region18: #{tpu_custom_call.1} parent=1 // pred_check
      _
    $region19: #{tpu_custom_call.1} parent=1 // pred_check_branch
      %318 = sbr.rel (0) target = $region21
    $region20: #{tpu_custom_call.1} parent=1 // pred_region
      %319 = dma.done [#allocation3], 2048
    $region21: #{tpu_custom_call.1} parent=1 // pred_fallthru
      _
    %320 = vsyncpa [#allocation3], 1

</llo_original>
